<compile_context>
chip_gen: v7x
topology: tpu7x:2x2x1
jax: 0.10.0
libtpu: 0.0.40
codegen_flags: <defaults>
</compile_context>

<pallas_src>
import functools

import jax
import jax.numpy as jnp
from jax.experimental import pallas as pl
from jax.experimental.pallas import tpu as pltpu


def _glu_kernel(x_ref, w_ref, b_ref, o_ref):
    # x_ref: (C, tt)    one batch's channels x token-tile (T on the lane axis)
    # w_ref: (2F, C)    BN-folded 1x1-conv weight, both GLU halves fused
    # b_ref: (2F, 1)    BN-folded bias
    # o_ref: (F, tt)    lhs * sigmoid(rhs)
    nf = o_ref.shape[0]
    y = jnp.dot(w_ref[...], x_ref[...],
                preferred_element_type=jnp.float32) + b_ref[...]
    lhs = y[:nf, :]          # static slice, sublane-aligned (nf multiple of 8)
    rhs = y[nf:, :]
    o_ref[...] = (lhs * jax.nn.sigmoid(rhs)).astype(o_ref.dtype)


@functools.partial(jax.jit, static_argnames=("filters",))
def glu_forward(data_0, w, b, bn_gamma, bn_beta, bn_mean, bn_var, *, filters):
    """data_0: (B, C, T) float32.  w: (2*filters, C), b: (2*filters,).

    BatchNorm2d is applied in eval mode (running stats) and folded into the
    1x1 conv weights/bias; the Pallas kernel runs the fused matmul + bias +
    GLU gating hot path directly in the NCT layout.
    """
    eps = 1e-5
    B, C, T = data_0.shape

    # Fold BatchNorm (eval mode) into the 1x1 conv; fuse both GLU halves.
    scale = bn_gamma / jnp.sqrt(bn_var + eps)            # (2F,)
    shift = bn_beta - bn_mean * scale                    # (2F,)
    w_eff = w * scale[:, None]                           # (2F, C)
    b_eff = (b * scale + shift)[:, None]                 # (2F, 1)

    # Token (T) tiling: lane-dense (multiple of 128), as large as practical.
    LANE = 128
    MAX_TT = 2048
    T_pad = ((T + LANE - 1) // LANE) * LANE
    if T_pad <= MAX_TT:
        tt = T_pad
    else:
        tt = MAX_TT
        T_pad = ((T_pad + tt - 1) // tt) * tt

    x = data_0
    if T_pad != T:
        x = jnp.pad(x, ((0, 0), (0, 0), (0, T_pad - T)))

    out = pl.pallas_call(
        _glu_kernel,
        out_shape=jax.ShapeDtypeStruct((B, filters, T_pad), data_0.dtype),
        grid_spec=pltpu.PrefetchScalarGridSpec(
            num_scalar_prefetch=0,
            grid=(B, T_pad // tt),
            in_specs=[
                # x tile: squeeze the batch dim, (C, tt) per step.
                pl.BlockSpec((None, C, tt), lambda bi, ti: (bi, 0, ti)),
                # Fused weight / bias: constant index -> resident in VMEM.
                pl.BlockSpec((2 * filters, C), lambda bi, ti: (0, 0)),
                pl.BlockSpec((2 * filters, 1), lambda bi, ti: (0, 0)),
            ],
            out_specs=pl.BlockSpec((None, filters, tt),
                                   lambda bi, ti: (bi, 0, ti)),
        ),
        compiler_params=pltpu.CompilerParams(
            # Both grid axes are independent -> shardable across v7x's 2 TCs.
            dimension_semantics=("parallel", "parallel"),
            # Explicit budget: safe on v7x (64 MiB physical) and v5e/v6e.
            vmem_limit_bytes=32 * 1024 * 1024,
        ),
    )(x, w_eff, b_eff)

    if T_pad != T:
        out = out[:, :, :T]
    return out                                            # (B, filters, T)


def _reference(data_0, w, b, bn_gamma, bn_beta, bn_mean, bn_var, filters):
    eps = 1e-5
    # 1x1 conv over channels: (B, C, T) -> (B, 2F, T)
    conv = jnp.einsum("oc,bct->bot", w, data_0) + b[None, :, None]
    scale = bn_gamma / jnp.sqrt(bn_var + eps)
    shift = bn_beta - bn_mean * scale
    y = conv * scale[None, :, None] + shift[None, :, None]
    lhs, rhs = y[:, :filters, :], y[:, filters:, :]
    return lhs * jax.nn.sigmoid(rhs)


if __name__ == "__main__":
    B, num_of_features, T = 2, 8, 16
    filters = 16

    key = jax.random.PRNGKey(0)
    k_x, k_w = jax.random.split(key)

    data_0 = jax.random.normal(k_x, (B, num_of_features, T), dtype=jnp.float32)

    # Conv2d weight (2*filters, C, 1, 1) with xavier_uniform_, bias zeros.
    fan_in, fan_out = num_of_features, 2 * filters
    bound = (6.0 / (fan_in + fan_out)) ** 0.5
    w = jax.random.uniform(
        k_w, (2 * filters, num_of_features), dtype=jnp.float32,
        minval=-bound, maxval=bound)
    b = jnp.zeros((2 * filters,), dtype=jnp.float32)

    # BatchNorm2d default parameters / running stats (eval mode).
    bn_gamma = jnp.ones((2 * filters,), dtype=jnp.float32)
    bn_beta = jnp.zeros((2 * filters,), dtype=jnp.float32)
    bn_mean = jnp.zeros((2 * filters,), dtype=jnp.float32)
    bn_var = jnp.ones((2 * filters,), dtype=jnp.float32)

    out = glu_forward(data_0, w, b, bn_gamma, bn_beta, bn_mean, bn_var,
                      filters=filters)
    out = jax.block_until_ready(out)

    ref = _reference(data_0, w, b, bn_gamma, bn_beta, bn_mean, bn_var, filters)
    assert out.shape == (B, filters, T)
    assert jnp.allclose(out, ref, atol=1e-5, rtol=1e-5)

    print("KERNEL_OK")
</pallas_src>

<mosaic_0001>
module attributes {stable_mosaic.version = 11 : i64} {
  func.func @_glu_kernel(%arg0: i32, %arg1: i32, %arg2: memref<1x8x128xf32, #tpu.memory_space<vmem>>, %arg3: memref<32x8xf32, #tpu.memory_space<vmem>>, %arg4: memref<32x1xf32, #tpu.memory_space<vmem>>, %arg5: memref<1x16x128xf32, #tpu.memory_space<vmem>>) attributes {dimension_semantics = [#tpu.dimension_semantics<parallel>, #tpu.dimension_semantics<parallel>], iteration_bounds = array<i64: 2, 1>, scalar_prefetch = 0 : i64, scratch_operands = 0 : i64, tpu.core_type = #tpu.core_type<tc>, window_params = [{transform_indices = @transform_0, window_bounds = array<i64: 1, 8, 128>}, {pipeline_mode = #tpu.pipeline_mode<synchronous>, transform_indices = @transform_1, window_bounds = array<i64: 32, 8>}, {pipeline_mode = #tpu.pipeline_mode<synchronous>, transform_indices = @transform_2, window_bounds = array<i64: 32, 1>}, {transform_indices = @transform_3, window_bounds = array<i64: 1, 16, 128>}]} {
    %c0 = arith.constant 0 : index
    %c0_0 = arith.constant 0 : index
    %0 = vector.load %arg3[%c0, %c0_0] : memref<32x8xf32, #tpu.memory_space<vmem>>, vector<32x8xf32>
    %c0_1 = arith.constant 0 : index
    %c0_2 = arith.constant 0 : index
    %c0_3 = arith.constant 0 : index
    %1 = vector.load %arg2[%c0_1, %c0_2, %c0_3] : memref<1x8x128xf32, #tpu.memory_space<vmem>>, vector<1x8x128xf32>
    %2 = vector.shape_cast %1 : vector<1x8x128xf32> to vector<8x128xf32>
    %cst = arith.constant dense<0.000000e+00> : vector<32x128xf32>
    %3 = tpu.matmul %0, %2, %cst {dimension_numbers = #tpu.dot_dimension_numbers<[1], [0], [0], [1], [0, 0, 1, 1], [], []>} : vector<32x8xf32>, vector<8x128xf32>, vector<32x128xf32> -> vector<32x128xf32>
    %c0_4 = arith.constant 0 : index
    %c0_5 = arith.constant 0 : index
    %4 = vector.load %arg4[%c0_4, %c0_5] : memref<32x1xf32, #tpu.memory_space<vmem>>, vector<32x1xf32>
    %5 = vector.broadcast %4 : vector<32x1xf32> to vector<32x128xf32>
    %6 = arith.addf %3, %5 : vector<32x128xf32>
    %7 = vector.extract_strided_slice %6 {offsets = [0, 0], sizes = [16, 128], strides = [1, 1]} : vector<32x128xf32> to vector<16x128xf32>
    %8 = vector.extract_strided_slice %6 {offsets = [16, 0], sizes = [16, 128], strides = [1, 1]} : vector<32x128xf32> to vector<16x128xf32>
    %9 = arith.negf %8 : vector<16x128xf32>
    %10 = math.exp %9 : vector<16x128xf32>
    %cst_6 = arith.constant 1.000000e+00 : f32
    %11 = vector.broadcast %cst_6 : f32 to vector<16x128xf32>
    %12 = arith.addf %11, %10 : vector<16x128xf32>
    %13 = arith.divf %11, %12 : vector<16x128xf32>
    %14 = arith.mulf %7, %13 : vector<16x128xf32>
    %c0_7 = arith.constant 0 : index
    %c0_8 = arith.constant 0 : index
    %c0_9 = arith.constant 0 : index
    %15 = vector.load %arg5[%c0_7, %c0_8, %c0_9] : memref<1x16x128xf32, #tpu.memory_space<vmem>>, vector<1x16x128xf32>
    %16 = vector.shape_cast %15 : vector<1x16x128xf32> to vector<16x128xf32>
    %17 = vector.shape_cast %14 : vector<16x128xf32> to vector<1x16x128xf32>
    tpu.vector_store %arg5[%c0_7, %c0_8, %c0_9], %17 {strides = array<i32>} : memref<1x16x128xf32, #tpu.memory_space<vmem>>, vector<1x16x128xf32>,
    return
  }
  func.func @transform_0(%arg0: i32, %arg1: i32) -> (i32, i32, i32) {
    %c0_i32 = arith.constant 0 : i32
    %c0_i32_0 = arith.constant 0 : i32
    return %arg0, %c0_i32, %arg1 : i32, i32, i32
  }
  func.func @transform_1(%arg0: i32, %arg1: i32) -> (i32, i32) {
    %c0_i32 = arith.constant 0 : i32
    %c0_i32_0 = arith.constant 0 : i32
    %c0_i32_1 = arith.constant 0 : i32
    return %c0_i32, %c0_i32_0 : i32, i32
  }
  func.func @transform_2(%arg0: i32, %arg1: i32) -> (i32, i32) {
    %c0_i32 = arith.constant 0 : i32
    %c0_i32_0 = arith.constant 0 : i32
    %c0_i32_1 = arith.constant 0 : i32
    return %c0_i32, %c0_i32_0 : i32, i32
  }
  func.func @transform_3(%arg0: i32, %arg1: i32) -> (i32, i32, i32) {
    %c0_i32 = arith.constant 0 : i32
    %c0_i32_0 = arith.constant 0 : i32
    return %arg0, %c0_i32, %arg1 : i32, i32, i32
  }
}

</mosaic_0001>

<llo_original>
// kernel: glu_forward.1
$region0: #{glu_forward.1}
  #allocation0 [shape = 'u32[]', space=smem, size = 0x4, offset = 0x4, fixed_abs, tag = 'smem constant byte address 0x4 - core index']
  #allocation1 [shape = 'u32[144,128]{1,0:T(1,128)}', space=vmem, size = 0x12000, scoped, tag = 'internal scratch']
  %s0 = inlined_call_operand.vmem [shape: f32[2,8,128], index: 0, kind: input, shape index: {}]
  %s1 = inlined_call_operand.vmem [shape: f32[32,8], index: 1, kind: input, shape index: {}]
  %s2 = inlined_call_operand.vmem [shape: f32[32,1], index: 2, kind: input, shape index: {}]
  %s3 = inlined_call_operand.hbm [shape: f32[2,16,128], index: 3, kind: output, shape index: {}]
  %s4 = sld [smem:[#allocation0]]
  $region45: #{glu_forward.1} parent=0
    _
  %s6 = ssub.s32 1, %s4
  %s7 = scalar_select 0, %s6, %s4
  $region1: #{glu_forward.1} parent=0
    #allocation2 [shape = 'u8[16384]{0}', space=vmem, size = 0x4000, scoped, tag = 'output window, operand 0']
    #allocation3 [shape = 's32[2]{0}', space=sflag, size = 0x8, scoped, tag = 'scoped memory for glu_forward.1']
    %8 = vsyncpa [#allocation3], 0
    %s9 = scalar_lea.sflag [#allocation3], 1
    %10 = vsyncpa %s9, 0
    loop: start=0, step=1, limit=4
    $region2: #{glu_forward.1} parent=1 // loop_pre_header
      _
    $region3: #{glu_forward.1} parent=1 // loop_header
      %s12 = sphi 0, %s16
      %p13 = scmp.ge.s32.totalorder %s12, 4
      %s19 = sphi 0, %s31
      %s20 = sphi 0, %s27
      %s21 = sphi 0, %s19
      %s22 = sphi 0, %s20
      %s23 = sphi 0, %s21
      %s24 = sphi 0, %s22
      %s36 = sphi 0, %s38
      %s39 = sphi 0, %s36
      %s40 = sphi 0, %s39
      %s56 = sphi 0, %s40
      %s60 = sphi 0, %s60
      %s62 = sphi 0, %s60
      %s63 = sphi 0, %s62
      %s77 = sphi 0, %s63
      %s81 = sphi 0, %s81
      %s83 = sphi 0, %s81
      %s84 = sphi 0, %s83
      %s98 = sphi 0, %s84
      %s106 = sphi 0, %s108
      %s109 = sphi 0, %s106
      %s110 = sphi 0, %s109
      %s126 = sphi 0, %s110
    $region4: #{glu_forward.1} parent=1 // loop_header_branch
      %15 = sbr.rel (%p13) target = $region8
    $region5: #{glu_forward.1} parent=1 // loop_body
      %s17 = ssub.s32 %s12, 1
      %s18 = ssub.s32 %s12, 2
      %s25 = sadd.s32 1, %s20
      %p26 = scmp.ge.s32.totalorder %s25, 1
      %s27 = scalar_select %p26, 0, %s25
      %s28 = sadd.s32 1, %s19
      %s29 = scalar_select %p26, %s28, %s19
      %p30 = scmp.ge.s32.totalorder %s29, 2
      %s31 = scalar_select %p30, 0, %s29
      %s32 = ssub.s32 %s19, %s31
      %s33 = ssub.s32 %s20, %s27
      %s34 = sor.u32 %s32, %s33
      %p35 = scmp.eq.s32.totalorder %s34, 0
      %s37 = sadd.s32 %s36, 1
      %s38 = scalar_select %p35, %s36, %s37
      %p41 = pneg %p35
      %p42 = scmp.eq.s32.totalorder %s12, 1
      %p43 = por %p41, %p42
      %p44 = scmp.ne.s32.totalorder %s36, %s39
      %p45 = scmp.eq.s32.totalorder %s12, 0
      %p46 = por %p44, %p45
      %p47 = scmp.ne.s32.totalorder %s36, %s39
      %p48 = scmp.eq.s32.totalorder %s17, 1
      %p49 = por %p47, %p48
      %p50 = scmp.ne.s32.totalorder %s39, %s40
      %p51 = scmp.eq.s32.totalorder %s17, 0
      %p52 = por %p50, %p51
      %p53 = scmp.ne.s32.totalorder %s39, %s40
      %p54 = scmp.eq.s32.totalorder %s18, 1
      %p55 = por %p53, %p54
      %p57 = scmp.ne.s32.totalorder %s40, %s56
      %p58 = scmp.eq.s32.totalorder %s18, 0
      %p59 = por %p57, %p58
      %s61 = sadd.s32 %s60, 1
      %p64 = scmp.eq.s32.totalorder %s12, 1
      %p65 = scmp.ne.s32.totalorder %s60, %s62
      %p66 = scmp.eq.s32.totalorder %s12, 0
      %p67 = por %p65, %p66
      %p68 = scmp.ne.s32.totalorder %s60, %s62
      %p69 = scmp.eq.s32.totalorder %s17, 1
      %p70 = por %p68, %p69
      %p71 = scmp.ne.s32.totalorder %s62, %s63
      %p72 = scmp.eq.s32.totalorder %s17, 0
      %p73 = por %p71, %p72
      %p74 = scmp.ne.s32.totalorder %s62, %s63
      %p75 = scmp.eq.s32.totalorder %s18, 1
      %p76 = por %p74, %p75
      %p78 = scmp.ne.s32.totalorder %s63, %s77
      %p79 = scmp.eq.s32.totalorder %s18, 0
      %p80 = por %p78, %p79
      %s82 = sadd.s32 %s81, 1
      %p85 = scmp.eq.s32.totalorder %s12, 1
      %p86 = scmp.ne.s32.totalorder %s81, %s83
      %p87 = scmp.eq.s32.totalorder %s12, 0
      %p88 = por %p86, %p87
      %p89 = scmp.ne.s32.totalorder %s81, %s83
      %p90 = scmp.eq.s32.totalorder %s17, 1
      %p91 = por %p89, %p90
      %p92 = scmp.ne.s32.totalorder %s83, %s84
      %p93 = scmp.eq.s32.totalorder %s17, 0
      %p94 = por %p92, %p93
      %p95 = scmp.ne.s32.totalorder %s83, %s84
      %p96 = scmp.eq.s32.totalorder %s18, 1
      %p97 = por %p95, %p96
      %p99 = scmp.ne.s32.totalorder %s84, %s98
      %p100 = scmp.eq.s32.totalorder %s18, 0
      %p101 = por %p99, %p100
      %s102 = ssub.s32 %s19, %s31
      %s103 = ssub.s32 %s20, %s27
      %s104 = sor.u32 %s102, %s103
      %p105 = scmp.eq.s32.totalorder %s104, 0
      %s107 = sadd.s32 %s106, 1
      %s108 = scalar_select %p105, %s106, %s107
      %p111 = pneg %p105
      %p112 = scmp.eq.s32.totalorder %s12, 1
      %p113 = por %p111, %p112
      %p114 = scmp.ne.s32.totalorder %s106, %s109
      %p115 = scmp.eq.s32.totalorder %s12, 0
      %p116 = por %p114, %p115
      %p117 = scmp.ne.s32.totalorder %s106, %s109
      %p118 = scmp.eq.s32.totalorder %s17, 1
      %p119 = por %p117, %p118
      %p120 = scmp.ne.s32.totalorder %s109, %s110
      %p121 = scmp.eq.s32.totalorder %s17, 0
      %p122 = por %p120, %p121
      %p123 = scmp.ne.s32.totalorder %s109, %s110
      %p124 = scmp.eq.s32.totalorder %s18, 1
      %p125 = por %p123, %p124
      %p127 = scmp.ne.s32.totalorder %s110, %s126
      %p128 = scmp.eq.s32.totalorder %s18, 0
      %p129 = por %p127, %p128
      %p130 = scmp.le.s32.totalorder 1, %s12
      %p131 = scmp.lt.s32.totalorder %s12, 3
      %p132 = pnand %p130, %p131
      %p133 = pneg %p132
      // Predicated region
      $region9: #{glu_forward.1} parent=5 // pred_check
        _
      $region10: #{glu_forward.1} parent=5 // pred_check_branch
        %135 = sbr.rel (%p132) target = $region12
      $region11: #{glu_forward.1} parent=5 // pred_region
        %s136 = ssub.s32 %s12, 1
        // Predicated region
        $region13: #{glu_forward.1} parent=11 // pred_check
          %p137 = pneg %p73
        $region14: #{glu_forward.1} parent=11 // pred_check_branch
          %139 = sbr.rel (%p137) target = $region16
        $region15: #{glu_forward.1} parent=11 // pred_region
          _
        $region16: #{glu_forward.1} parent=11 // pred_fallthru
          _
        // Predicated region
        $region17: #{glu_forward.1} parent=11 // pred_check
          %p140 = pneg %p94
        $region18: #{glu_forward.1} parent=11 // pred_check_branch
          %142 = sbr.rel (%p140) target = $region20
        $region19: #{glu_forward.1} parent=11 // pred_region
          _
        $region20: #{glu_forward.1} parent=11 // pred_fallthru
          _
      $region12: #{glu_forward.1} parent=5 // pred_fallthru
        _
      %p143 = scmp.lt.s32.totalorder %s12, 2
      // Predicated region
      $region21: #{glu_forward.1} parent=5 // pred_check
        %p144 = pneg %p143
      $region22: #{glu_forward.1} parent=5 // pred_check_branch
        %146 = sbr.rel (%p144) target = $region24
      $region23: #{glu_forward.1} parent=5 // pred_region
        // Predicated region
        $region25: #{glu_forward.1} parent=23 // pred_check
          %p147 = pneg %p46
        $region26: #{glu_forward.1} parent=23 // pred_check_branch
          %149 = sbr.rel (%p147) target = $region28
        $region27: #{glu_forward.1} parent=23 // pred_region
          %p150 = scmp.lt.s32.totalorder %s19, 1
          %s151 = scalar_select %p150, %s19, 1
          %p152 = scmp.lt.s32.totalorder %s20, 0
          %s153 = scalar_select %p152, %s20, 0
          %s154 = sadd.s32 %s153, %s151
          %s155 = smul.addr %s154, 8
          %s156 = scalar_lea.vmem %s0, %s155
        $region28: #{glu_forward.1} parent=23 // pred_fallthru
          _
      $region24: #{glu_forward.1} parent=5 // pred_fallthru
        _
      %p157 = scmp.le.s32.totalorder 1, %s12
      %p158 = scmp.lt.s32.totalorder %s12, 3
      %p159 = pnand %p157, %p158
      %p160 = pneg %p159
      // Predicated region
      $region29: #{glu_forward.1} parent=5 // pred_check
        _
      $region30: #{glu_forward.1} parent=5 // pred_check_branch
        %162 = sbr.rel (%p159) target = $region32
      $region31: #{glu_forward.1} parent=5 // pred_region
        %s163 = ssub.s32 %s12, 1
        %p164 = scmp.lt.s32.totalorder %s21, 1
        %s165 = scalar_select %p164, %s21, 1
        %p166 = scmp.lt.s32.totalorder %s22, 0
        %s167 = scalar_select %p166, %s22, 0
        %s168 = sadd.s32 %s167, %s165
        %s169 = smul.addr %s168, 8
        %s170 = scalar_lea.vmem %s0, %s169
        %p171 = pneg %p52
        %p172 = pneg %p49
        %p173 = pneg %p73
        %p174 = pneg %p70
        %p175 = pneg %p94
        %p176 = pneg %p91
        %p177 = pneg %p122
        %p178 = pneg %p119
        %s179 = sand.u32 %s109, 1
        %s180 = scalar_lea.sflag [#allocation3], %s179
        %s181 = sand.u32 %s109, 1
        %s182 = smul.addr %s181, 16
        %s183 = scalar_lea.vmem [#allocation2], %s182
        %p184 = scmp.lt.s32.totalorder %s21, 1
        %s185 = scalar_select %p184, %s21, 1
        %p186 = scmp.lt.s32.totalorder %s22, 0
        %s187 = scalar_select %p186, %s22, 0
        %s188 = sadd.s32 %s187, %s185
        %s189 = smul.addr %s188, 8
        %s190 = scalar_lea.vmem %s0, %s189
        %v191 = vld [vmem:[%s1] sm:$0xff]
        %v192 = vld [vmem:[%s1 + $0x8] sm:$0xff]
        %v193 = vld [vmem:[%s1 + $0x10] sm:$0xff]
        %v194 = vld [vmem:[%s1 + $0x18] sm:$0xff]
        %v195 = vld [vmem:[%s190] sm:$0xff]
        %v196 = vld [vmem:[%s2] sm:$0xff]
        %v197 = vld [vmem:[%s2 + $0x8] sm:$0xff]
        %v198 = vld [vmem:[%s2 + $0x10] sm:$0xff]
        %v199 = vld [vmem:[%s2 + $0x18] sm:$0xff]
        %201 = vset.pattern.permute.xlu0 0
        %202 = vperm.xlu0 %201, %v196
        %v203 = vpop.permute.xlu0 %202
        %206 = vset.pattern.permute.xlu0 0
        %207 = vperm.xlu0 %206, %v197
        %v208 = vpop.permute.xlu0 %207
        %211 = vset.pattern.permute.xlu0 0
        %212 = vperm.xlu0 %211, %v198
        %v213 = vpop.permute.xlu0 %212
        %216 = vset.pattern.permute.xlu0 0
        %217 = vperm.xlu0 %216, %v199
        %v218 = vpop.permute.xlu0 %217
        %vm220 = vcmask 64512
        %v222 = vsel %vm220, %v191, 0
        %v225 = vsel %vm220, %v192, 0
        %v228 = vsel %vm220, %v193, 0
        %v231 = vsel %vm220, %v194, 0
        %233 = vmatprep.subr.mxu0 0.0
        %234 = vmatpush1.msra.mxu0 %v195
        %235 = vmatprep.subr.mxu0 0.0
        %236 = vmatpush1.msra.mxu0 0.0
        %237 = vmatprep.subr.mxu0 0.0
        %238 = vmatpush1.msra.mxu0 0.0
        %239 = vmatprep.subr.mxu0 0.0
        %240 = vmatpush1.msra.mxu0 0.0
        %241 = vmatprep.subr.mxu0 0.0
        %242 = vmatpush1.msra.mxu0 0.0
        %243 = vmatprep.subr.mxu0 0.0
        %244 = vmatpush1.msra.mxu0 0.0
        %245 = vmatprep.subr.mxu0 0.0
        %246 = vmatpush1.msra.mxu0 0.0
        %247 = vmatprep.subr.mxu0 0.0
        %248 = vmatpush1.msra.mxu0 0.0
        %249 = vmatprep.subr.mxu0 0.0
        %250 = vmatpush1.msra.mxu0 0.0
        %251 = vmatprep.subr.mxu0 0.0
        %252 = vmatpush1.msra.mxu0 0.0
        %253 = vmatprep.subr.mxu0 0.0
        %254 = vmatpush1.msra.mxu0 0.0
        %255 = vmatprep.subr.mxu0 0.0
        %256 = vmatpush1.msra.mxu0 0.0
        %257 = vmatprep.subr.mxu0 0.0
        %258 = vmatpush1.msra.mxu0 0.0
        %259 = vmatprep.subr.mxu0 0.0
        %260 = vmatpush1.msra.mxu0 0.0
        %261 = vmatprep.subr.mxu0 0.0
        %262 = vmatpush1.msra.mxu0 0.0
        %263 = vmatprep.subr.mxu0 0.0
        %264 = vmatpush1.msra.mxu0 0.0
        %265 = vmatprep.subr.mxu0 0.0
        %266 = vmatpush1.msra.mxu0 0.0
        %267 = vmatprep.subr.mxu0 0.0
        %268 = vmatpush1.msra.mxu0 0.0
        %269 = vmatprep.subr.mxu0 0.0
        %270 = vmatpush1.msra.mxu0 0.0
        %271 = vmatprep.subr.mxu0 0.0
        %272 = vmatpush1.msra.mxu0 0.0
        %273 = vmatprep.subr.mxu0 0.0
        %274 = vmatpush1.msra.mxu0 0.0
        %275 = vmatprep.subr.mxu0 0.0
        %276 = vmatpush1.msra.mxu0 0.0
        %277 = vmatprep.subr.mxu0 0.0
        %278 = vmatpush1.msra.mxu0 0.0
        %279 = vmatprep.subr.mxu0 0.0
        %280 = vmatpush1.msra.mxu0 0.0
        %281 = vmatprep.subr.mxu0 0.0
        %282 = vmatpush1.msra.mxu0 0.0
        %283 = vmatprep.subr.mxu0 0.0
        %284 = vmatpush1.msra.mxu0 0.0
        %285 = vmatprep.subr.mxu0 0.0
        %286 = vmatpush1.msra.mxu0 0.0
        %287 = vmatprep.subr.mxu0 0.0
        %288 = vmatpush1.msra.mxu0 0.0
        %289 = vmatprep.subr.mxu0 0.0
        %290 = vmatpush1.msra.mxu0 0.0
        %291 = vmatprep.subr.mxu0 0.0
        %292 = vmatpush1.msra.mxu0 0.0
        %293 = vmatprep.subr.mxu0 0.0
        %294 = vmatpush1.msra.mxu0 0.0
        %295 = vmatprep.subr.mxu0 0.0
        %296 = vmatpush1.msra.mxu0 0.0
        %297 = vmatprep.mubr.f32.mxu0 0.0
        %298 = vmatmul.mubr.f32.gmra.mrb[0].mxu0 %v222
        %v299 = vpop.f32.mrb[0].mxu0
        %v300 = vadd.f32 %v203, %v299
        %v301 = vpop.f32.mrb[0].mxu0
        %302 = vmatprep.mubr.f32.mxu0 0.0
        %303 = vmatmul.mubr.f32.gmra.mrb[0].mxu0 %v225
        %v304 = vpop.f32.mrb[0].mxu0
        %v305 = vadd.f32 %v208, %v304
        %v306 = vpop.f32.mrb[0].mxu0
        %307 = vmatprep.mubr.f32.mxu0 0.0
        %308 = vmatmul.mubr.f32.gmra.mrb[0].mxu0 %v228
        %v309 = vpop.f32.mrb[0].mxu0
        %v310 = vadd.f32 %v213, %v309
        %v311 = vpop.f32.mrb[0].mxu0
        %312 = vmatprep.mubr.f32.mxu0 0.0
        %313 = vmatmul.mubr.f32.gmra.mrb[0].mxu0 %v231
        %v314 = vpop.f32.mrb[0].mxu0
        %v315 = vadd.f32 %v218, %v314
        %v316 = vpop.f32.mrb[0].mxu0
        %317 = vdwg.mxu0
        %v318 = vxor.u32 %v310, 2147483648
        %v319 = vxor.u32 %v315, 2147483648
        %v320 = vmul.f32 %v318, 1.442695
        %v321 = vpow.pop %v320
        %v322 = vmul.f32 %v319, 1.442695
        %v323 = vpow.pop %v322
        %v324 = vadd.f32 %v321, 1.0
        %v325 = vadd.f32 %v323, 1.0
        %v326 = vrcp.pop %v324
        %v327 = vmul.f32 1.0, %v326
        %v328 = vrcp.pop %v325
        %v329 = vmul.f32 1.0, %v328
        %v330 = vmul.f32 %v300, %v327
        %v331 = vmul.f32 %v305, %v329
        %332 = vst [vmem:[%s183] sm:$0xff] %v330
        %333 = vst [vmem:[%s183 + $0x8] sm:$0xff] %v331
        %s334 = sand.u32 %s109, 1
        %s335 = scalar_lea.sflag [#allocation3], %s334
        %s336 = sand.u32 %s109, 1
        %s337 = smul.addr %s336, 16
        %s338 = scalar_lea.vmem [#allocation2], %s337
        // Predicated region
        $region33: #{glu_forward.1} parent=31 // pred_check
          %p339 = pneg %p119
        $region34: #{glu_forward.1} parent=31 // pred_check_branch
          %341 = sbr.rel (%p339) target = $region36
        $region35: #{glu_forward.1} parent=31 // pred_region
          %s343 = ssub.s32 256, 256
          %344 = vsyncadd %s335, %s343
          %s345 = smul.addr %s21, 2
          %s346 = sadd.s32 %s22, %s345
          %s347 = smul.addr %s346, 128
          %s348 = scalar_lea.hbm %s3, %s347
          %s349 = sshll.u32 %s338, 4
          %s350 = int_to_ptr.vmem [resolvable:$true] %s349
          %355 = dma.vmem_to_hbm [thread:$0]  %s350, 256, %s348, %s335, 128, 128, 8
        $region36: #{glu_forward.1} parent=31 // pred_fallthru
          _
      $region32: #{glu_forward.1} parent=5 // pred_fallthru
        _
      %p356 = scmp.le.s32.totalorder 2, %s12
      // Predicated region
      $region37: #{glu_forward.1} parent=5 // pred_check
        %p357 = pneg %p356
      $region38: #{glu_forward.1} parent=5 // pred_check_branch
        %359 = sbr.rel (%p357) target = $region40
      $region39: #{glu_forward.1} parent=5 // pred_region
        %s360 = ssub.s32 %s12, 2
        // Predicated region
        $region41: #{glu_forward.1} parent=39 // pred_check
          %p361 = pneg %p125
        $region42: #{glu_forward.1} parent=39 // pred_check_branch
          %363 = sbr.rel (%p361) target = $region44
        $region43: #{glu_forward.1} parent=39 // pred_region
          %s364 = sand.u32 %s110, 1
          %s365 = scalar_lea.sflag [#allocation3], %s364
          %s366 = sand.u32 %s110, 1
          %s367 = smul.addr %s366, 16
          %s368 = scalar_lea.vmem [#allocation2], %s367
          %369 = dma.done %s365, 256
        $region44: #{glu_forward.1} parent=39 // pred_fallthru
          _
      $region40: #{glu_forward.1} parent=5 // pred_fallthru
        _
    $region6: #{glu_forward.1} parent=1 // loop_footer
      %s16 = sadd.s32 1, %s12
    $region7: #{glu_forward.1} parent=1 // loop_footer_branch
      %11 = sbr.rel target = $region3
    $region8: #{glu_forward.1} parent=1 // loop_exit
      _
    %370 = vsyncpa [#allocation3], 1
    %s371 = scalar_lea.sflag [#allocation3], 1
    %372 = vsyncpa %s371, 1

</llo_original>
